<compile_context>
chip_gen: v7x
topology: tpu7x:2x2x1
jax: 0.10.0
libtpu: 0.0.40
codegen_flags: <defaults>
</compile_context>

<pallas_src>
import jax
import jax.numpy as jnp
from jax.experimental import pallas as pl
from jax.experimental.pallas import tpu as pltpu


# ------------------------------- Pallas kernel ------------------------------


def _fused_resize_conv_kernel(xs_ref, w_ref, b_ref, o_ref):
    """One (w-chunk, row-block) tile of the fused upsample + conv.

    xs_ref: (TR, Hp, Kp)        bf16  activations; lanes = (t_d, t_h, w', cin), K padded to 128
    w_ref:  (Kp, Wc*8*Cout)     bf16  folded, W-banded weights (shared by all W chunks)
    b_ref:  (1,  Wc*8*Cout)     f32   bias broadcast over (w, a, b, c)
    o_ref:  (TR, Hp, Wc*8*Cout) f32   outputs; lanes = (w, a, b, c, cout)
    """
    tr, hp, kp = xs_ref.shape
    lhs = xs_ref[...].reshape(tr * hp, kp)        # layout-preserving: hp % 8 == 0, kp % 128 == 0
    acc = jnp.dot(lhs, w_ref[...], preferred_element_type=jnp.float32)   # single MXU contraction
    o_ref[...] = (acc + b_ref[...]).reshape(o_ref.shape)


# ------------------------------ tiling helpers -------------------------------


def _vmem_limit_bytes():
    """Generation-aware scoped-VMEM limit (v5e/v6e: 128 MiB parts -> 96 MiB,
    v7x: 64 MiB physical -> 48 MiB). Falls back to a known-safe 32 MiB."""
    try:
        info = pltpu.get_tpu_info()
        cap = None
        for attr in ("vmem_capacity_bytes", "vmem_size_bytes"):
            if hasattr(info, attr):
                cap = int(getattr(info, attr))
                break
        if cap:
            return max(min(cap * 3 // 4, 96 * 1024 * 1024), 16 * 1024 * 1024)
    except Exception:
        pass
    return 32 * 1024 * 1024


def _pick_w_chunk(w, cin, cout, weight_budget_bytes):
    """Largest divisor Wc of W whose (double-buffered) block-banded weights fit the
    weight budget. Larger Wc -> denser band (Wc/(Wc+2)) and fewer halo columns."""
    best = 1
    for wc in range(1, w + 1):
        if w % wc:
            continue
        k_pad = -(-(9 * (wc + 2) * cin) // 128) * 128
        n_lane = wc * 8 * cout
        resident = 2 * (k_pad * n_lane * 2 + n_lane * 4)   # default 2-deep buffering
        if resident <= weight_budget_bytes:
            best = wc
    return best


def _pick_row_tile(m_outer, h_pad, k_pad, n_lane, budget_bytes):
    """Rows-per-step tile TR (divisor of N*D). Prefer the smallest TR giving
    TR*H >= 256 matmul rows (fills a 256-wide MXU and leaves grid steps for
    pipelining / megacore); otherwise the largest TR that fits the budget."""
    fitting = []
    for t in range(1, m_outer + 1):
        if m_outer % t:
            continue
        blk = 2 * (t * h_pad * k_pad * 2        # bf16 activation block, double-buffered
                   + t * h_pad * n_lane * 4)    # f32 output block, double-buffered
        if blk <= budget_bytes:
            fitting.append(t)
    if not fitting:
        return 1
    full = [t for t in fitting if t * h_pad >= 256]
    return min(full) if full else max(fitting)


# ------------------------- ResizeConv forward (JAX) -------------------------


def resize_conv_forward(x, weight, bias, *, packed_output=False):
    """ResizeConv.forward for dim=3, planar=False, kernel_size=3, mode='nearest'.

    x:      (N, Cin, D, H, W)    float32 (NCDHW, PyTorch layout)
    weight: (Cout, Cin, 3, 3, 3) float32 (PyTorch Conv3d weight layout)
    bias:   (Cout,)              float32
    returns (N, Cout, 2D, 2H, 2W) float32   (or the packed kernel layout if
                                             packed_output=True)
    """
    n, cin, d, h, w = x.shape
    cout = weight.shape[0]

    vmem_limit = _vmem_limit_bytes()
    wc = _pick_w_chunk(w, cin, cout, weight_budget_bytes=vmem_limit // 3)
    n_w = w // wc

    k_lane = 9 * (wc + 2) * cin              # contraction: (t_d, t_h, w', cin)
    k_pad = -(-k_lane // 128) * 128          # lane-aligned K
    n_lane = wc * 8 * cout                   # output lanes: (w, a, b, c, cout)
    h_pad = -(-h // 8) * 8                   # sublane-aligned H

    # ---- fold the nearest-2x upsample into the 3x3x3 conv ----
    # g[a, t, k] = 1 iff original-kernel tap k at output sub-position a reads
    # padded-original offset t (t=0,1,2 -> d-1, d, d+1).
    g = jnp.array([[[1, 0, 0], [0, 1, 1], [0, 0, 0]],
                   [[0, 0, 0], [1, 1, 0], [0, 0, 1]]], dtype=jnp.float32)
    wk = jnp.einsum('adk,bel,cfm,oiklm->defiabco', g, g, g, weight.astype(jnp.float32))
    wk = wk.reshape(3, 3, 3, cin, 8 * cout)  # (t_d, t_h, t_w, cin, (a,b,c,cout))

    # ---- block-banded RHS (identical for every W chunk): K rows = (t_d,t_h,w',cin) ----
    band = jnp.zeros((3, 3, wc + 2, cin, wc, 8 * cout), jnp.float32)
    for wl in range(wc):
        band = band.at[:, :, wl:wl + 3, :, wl, :].set(wk)
    w_banded = band.reshape(k_lane, n_lane)
    w_banded = jnp.pad(w_banded, ((0, k_pad - k_lane), (0, 0))).astype(jnp.bfloat16)

    bias_row = jnp.tile(bias.astype(jnp.float32), wc * 8).reshape(1, n_lane)

    # ---- activations: channels-last, zero-pad by 1, stack all 9 (t_d,t_h) shifts ----
    # (single-K contraction: one MXU dot per grid step, no unaligned in-kernel slices)
    x_cl = jnp.transpose(x, (0, 2, 3, 4, 1))                        # (N, D, H, W, Cin)
    x_pad = jnp.pad(x_cl, ((0, 0), (1, 1), (1, 1), (1, 1), (0, 0)))
    shifts = jnp.stack([x_pad[:, td_:td_ + d, th_:th_ + h, :, :]
                        for td_ in range(3) for th_ in range(3)], axis=3)
    # per-W-chunk halo windows (only (Wc+2)/Wc replication along W)
    chunks = jnp.stack([shifts[:, :, :, :, wi * wc:wi * wc + wc + 2, :]
                        for wi in range(n_w)], axis=4)              # (N,D,H,9,nW,Wc+2,Cin)
    xs = jnp.transpose(chunks, (4, 0, 1, 2, 3, 5, 6)).reshape(n_w, n * d, h, k_lane)
    xs = jnp.pad(xs, ((0, 0), (0, 0), (0, h_pad - h), (0, k_pad - k_lane)))
    xs = xs.astype(jnp.bfloat16)                                    # (nW, N*D, Hp, Kp)

    # ---- row tiling: subtract resident (double-buffered) weight/bias bytes ----
    resident = 2 * (w_banded.size * 2 + bias_row.size * 4)
    block_budget = max(vmem_limit - resident - (2 << 20), 1 << 20)
    tr = _pick_row_tile(n * d, h_pad, k_pad, n_lane, block_budget)
    grid = (n_w, (n * d) // tr)

    # useful conv FLOPs (band zeros excluded) + streamed bytes
    cost = pl.CostEstimate(
        flops=2 * n * (2 * d) * (2 * h) * (2 * w) * cout * 27 * cin,
        transcendentals=0,
        bytes_accessed=int(xs.size) * 2 + int(w_banded.size) * 2 + int(bias_row.size) * 4
                       + n_w * n * d * h_pad * n_lane * 4,
    )

    out = pl.pallas_call(
        _fused_resize_conv_kernel,
        out_shape=jax.ShapeDtypeStruct((n_w, n * d, h_pad, n_lane), jnp.float32),
        grid_spec=pltpu.PrefetchScalarGridSpec(
            num_scalar_prefetch=0,
            grid=grid,
            in_specs=[
                pl.BlockSpec((pl.Squeezed(), tr, h_pad, k_pad),
                             lambda wi, ri: (wi, ri, 0, 0)),
                # banded weights & bias: constant index -> resident across the grid.
                # TODO(synk): pipeline_mode=pl.Buffered(1) here would halve their VMEM
                # footprint on v7x once single-buffered resident operands are supported.
                pl.BlockSpec((k_pad, n_lane), lambda wi, ri: (0, 0)),
                pl.BlockSpec((1, n_lane), lambda wi, ri: (0, 0)),
            ],
            out_specs=pl.BlockSpec((pl.Squeezed(), tr, h_pad, n_lane),
                                   lambda wi, ri: (wi, ri, 0, 0)),
        ),
        compiler_params=pltpu.CompilerParams(
            dimension_semantics=("parallel", "parallel"),
            vmem_limit_bytes=vmem_limit,
        ),
        cost_estimate=cost,
    )(xs, w_banded, bias_row)

    out = out[:, :, :h, :]                    # drop H padding rows (no-op when H % 8 == 0)

    if packed_output:
        # Kernel-native layout (nW, N*D, H, Wc*8*Cout), lanes = (w, a, b, c, cout).
        # Consumers that can fuse the pixel-shuffle should take this and skip the
        # 16x-sized HBM round trip of the transpose below.
        return out

    # ---- pixel-shuffle back to NCDHW (pure layout glue on the output) ----
    out = out.reshape(n_w, n, d, h, wc, 2, 2, 2, cout)
    out = jnp.transpose(out, (1, 8, 2, 5, 3, 6, 0, 4, 7))   # (N, Cout, D,a, H,b, nW,Wc,c)
    return out.reshape(n, cout, 2 * d, 2 * h, 2 * w)


# ---------------------------------- main ------------------------------------


if __name__ == "__main__":
    key = jax.random.PRNGKey(0)
    k_x, k_w, k_b = jax.random.split(key, 3)

    # small shapes: batch=2, in_channels=4, out_channels=8, spatial=8 -> output spatial=16
    N, Cin, Cout = 2, 4, 8
    D = H = W = 8

    x = jax.random.normal(k_x, (N, Cin, D, H, W), dtype=jnp.float32)

    # deterministic PyTorch-style init: uniform(-1/sqrt(fan_in), 1/sqrt(fan_in))
    fan_in = Cin * 3 * 3 * 3
    bound = 1.0 / (fan_in ** 0.5)
    weight = jax.random.uniform(k_w, (Cout, Cin, 3, 3, 3), dtype=jnp.float32,
                                minval=-bound, maxval=bound)
    bias = jax.random.uniform(k_b, (Cout,), dtype=jnp.float32,
                              minval=-bound, maxval=bound)

    fwd = jax.jit(resize_conv_forward)
    out = jax.block_until_ready(fwd(x, weight, bias))
    assert out.shape == (N, Cout, 2 * D, 2 * H, 2 * W), out.shape

    # reference: nearest 2x upsample + Conv3d(kernel=3, padding=1) + bias
    x_up = jnp.repeat(jnp.repeat(jnp.repeat(x, 2, axis=2), 2, axis=3), 2, axis=4)
    ref = jax.lax.conv_general_dilated(
        x_up, weight, window_strides=(1, 1, 1),
        padding=((1, 1), (1, 1), (1, 1)),
        dimension_numbers=("NCDHW", "OIDHW", "NCDHW"),
    ) + bias.reshape(1, Cout, 1, 1, 1)
    ref = jax.block_until_ready(ref)

    err = float(jnp.max(jnp.abs(out - ref)))
    # streamed operands are bf16 (f32 accumulate), so allow bf16-level error
    assert jnp.allclose(out, ref, rtol=2e-2, atol=2e-2), err

    print("KERNEL_OK")
</pallas_src>

<mosaic_0001>
module attributes {stable_mosaic.version = 11 : i64} {
  func.func @_fused_resize_conv_kernel(%arg0: i32, %arg1: i32, %arg2: memref<1x16x8x384xbf16, #tpu.memory_space<vmem>>, %arg3: memref<384x512xbf16, #tpu.memory_space<vmem>>, %arg4: memref<1x512xf32, #tpu.memory_space<vmem>>, %arg5: memref<1x16x8x512xf32, #tpu.memory_space<vmem>>) attributes {dimension_semantics = [#tpu.dimension_semantics<parallel>, #tpu.dimension_semantics<parallel>], iteration_bounds = array<i64: 1, 1>, scalar_prefetch = 0 : i64, scratch_operands = 0 : i64, tpu.core_type = #tpu.core_type<tc>, window_params = [{transform_indices = @transform_0, window_bounds = array<i64: 1, 16, 8, 384>}, {pipeline_mode = #tpu.pipeline_mode<synchronous>, transform_indices = @transform_1, window_bounds = array<i64: 384, 512>}, {pipeline_mode = #tpu.pipeline_mode<synchronous>, transform_indices = @transform_2, window_bounds = array<i64: 1, 512>}, {transform_indices = @transform_3, window_bounds = array<i64: 1, 16, 8, 512>}]} {
    %c0 = arith.constant 0 : index
    %c0_0 = arith.constant 0 : index
    %c0_1 = arith.constant 0 : index
    %c0_2 = arith.constant 0 : index
    %0 = vector.load %arg2[%c0, %c0_0, %c0_1, %c0_2] : memref<1x16x8x384xbf16, #tpu.memory_space<vmem>>, vector<1x16x8x384xbf16>
    %1 = vector.shape_cast %0 : vector<1x16x8x384xbf16> to vector<16x8x384xbf16>
    %2 = vector.shape_cast %1 : vector<16x8x384xbf16> to vector<128x384xbf16>
    %c0_3 = arith.constant 0 : index
    %c0_4 = arith.constant 0 : index
    %3 = vector.load %arg3[%c0_3, %c0_4] : memref<384x512xbf16, #tpu.memory_space<vmem>>, vector<384x512xbf16>
    %cst = arith.constant dense<0.000000e+00> : vector<128x512xf32>
    %4 = tpu.matmul %2, %3, %cst {dimension_numbers = #tpu.dot_dimension_numbers<[1], [0], [0], [1], [0, 0, 1, 1], [], []>} : vector<128x384xbf16>, vector<384x512xbf16>, vector<128x512xf32> -> vector<128x512xf32>
    %c0_5 = arith.constant 0 : index
    %c0_6 = arith.constant 0 : index
    %5 = vector.load %arg4[%c0_5, %c0_6] : memref<1x512xf32, #tpu.memory_space<vmem>>, vector<1x512xf32>
    %6 = vector.broadcast %5 : vector<1x512xf32> to vector<128x512xf32>
    %7 = arith.addf %4, %6 : vector<128x512xf32>
    %8 = vector.shape_cast %7 : vector<128x512xf32> to vector<16x8x512xf32>
    %c0_7 = arith.constant 0 : index
    %c0_8 = arith.constant 0 : index
    %c0_9 = arith.constant 0 : index
    %c0_10 = arith.constant 0 : index
    %9 = vector.load %arg5[%c0_7, %c0_8, %c0_9, %c0_10] : memref<1x16x8x512xf32, #tpu.memory_space<vmem>>, vector<1x16x8x512xf32>
    %10 = vector.shape_cast %9 : vector<1x16x8x512xf32> to vector<16x8x512xf32>
    %11 = vector.shape_cast %8 : vector<16x8x512xf32> to vector<1x16x8x512xf32>
    tpu.vector_store %arg5[%c0_7, %c0_8, %c0_9, %c0_10], %11 {strides = array<i32>} : memref<1x16x8x512xf32, #tpu.memory_space<vmem>>, vector<1x16x8x512xf32>,
    return
  }
  func.func @transform_0(%arg0: i32, %arg1: i32) -> (i32, i32, i32, i32) {
    %c0_i32 = arith.constant 0 : i32
    %c0_i32_0 = arith.constant 0 : i32
    %c0_i32_1 = arith.constant 0 : i32
    return %arg0, %arg1, %c0_i32, %c0_i32_0 : i32, i32, i32, i32
  }
  func.func @transform_1(%arg0: i32, %arg1: i32) -> (i32, i32) {
    %c0_i32 = arith.constant 0 : i32
    %c0_i32_0 = arith.constant 0 : i32
    %c0_i32_1 = arith.constant 0 : i32
    return %c0_i32, %c0_i32_0 : i32, i32
  }
  func.func @transform_2(%arg0: i32, %arg1: i32) -> (i32, i32) {
    %c0_i32 = arith.constant 0 : i32
    %c0_i32_0 = arith.constant 0 : i32
    %c0_i32_1 = arith.constant 0 : i32
    return %c0_i32, %c0_i32_0 : i32, i32
  }
  func.func @transform_3(%arg0: i32, %arg1: i32) -> (i32, i32, i32, i32) {
    %c0_i32 = arith.constant 0 : i32
    %c0_i32_0 = arith.constant 0 : i32
    %c0_i32_1 = arith.constant 0 : i32
    return %arg0, %arg1, %c0_i32, %c0_i32_0 : i32, i32, i32, i32
  }
}

</mosaic_0001>

<llo_original>
// kernel: tile.8
$region0: #{tile.8}
  #allocation2 [shape = 's32[1]{0}', space=sflag, size = 0x4, scoped, tag = 'scoped memory for tile.8']
  %s0 = inlined_call_operand.hbm [shape: f32[8], index: 0, kind: input, shape index: {}]
  %s1 = inlined_call_operand.vmem [shape: f32[64,8], index: 1, kind: output, shape index: {}]
  $region1: #{tile.8} parent=0
    #allocation0 [shape = 'u8[512]{0}', space=vmem, size = 0x400, scoped, tag = 'operand span for operand 0']
    #allocation1 [shape = 's32[1]{0}', space=sflag, size = 0x4, scoped, tag = 'scoped memory for tile.8']
    %2 = vsyncpa [#allocation1], 0
    // Predicated region
    $region2: #{tile.8} parent=1 // pred_check
      _
    $region3: #{tile.8} parent=1 // pred_check_branch
      %4 = sbr.rel (0) target = $region5
    $region4: #{tile.8} parent=1 // pred_region
      %s6 = ssub.s32 16, 16
      %7 = vsyncadd [#allocation1], %s6
      %s9 = sshll.u32 [#allocation0], 4
      %s10 = int_to_ptr.vmem [resolvable:$true] %s9
      %12 = dma.hbm_to_vmem [thread:$0]  %s0, 16, %s10, [#allocation1]
    $region5: #{tile.8} parent=1 // pred_fallthru
      _
    // Predicated region
    $region6: #{tile.8} parent=1 // pred_check
      _
    $region7: #{tile.8} parent=1 // pred_check_branch
      %14 = sbr.rel (0) target = $region9
    $region8: #{tile.8} parent=1 // pred_region
      %15 = dma.done [#allocation1], 16
    $region9: #{tile.8} parent=1 // pred_fallthru
      _
    %v16 = vld [vmem:[#allocation0] ss:$0 sm:$0xff]
    %17 = vst [vmem:[%s1] sm:$0xff] %v16
    %s18 = scalar_lea.vmem %s1, 8
    %19 = vst [vmem:[%s18] sm:$0xff] %v16
    %s20 = scalar_lea.vmem %s1, 16
    %21 = vst [vmem:[%s20] sm:$0xff] %v16
    %s22 = scalar_lea.vmem %s1, 24
    %23 = vst [vmem:[%s22] sm:$0xff] %v16
    %s24 = scalar_lea.vmem %s1, 32
    %25 = vst [vmem:[%s24] sm:$0xff] %v16
    %s26 = scalar_lea.vmem %s1, 40
    %27 = vst [vmem:[%s26] sm:$0xff] %v16
    %s28 = scalar_lea.vmem %s1, 48
    %29 = vst [vmem:[%s28] sm:$0xff] %v16
    %s30 = scalar_lea.vmem %s1, 56
    %31 = vst [vmem:[%s30] sm:$0xff] %v16
    %32 = vsyncpa [#allocation1], 1

// kernel: tile.9
$region0: #{tile.9}
  %s0 = inlined_call_operand.vmem [shape: f32[64,8], index: 0, kind: input, shape index: {}]
  %s1 = inlined_call_operand.vmem [shape: f32[1,512], index: 1, kind: output, shape index: {}]
  $region1: #{tile.9} parent=0
    #allocation0 [shape = 'u8[16384]{0}', space=vmem, size = 0x4000, scoped, tag = 'scoped mem for output reshape']
    %s2 = smov 3
    %v3 = vld [vmem:[%s0] ss:$16 sm:%s2]
    %s4 = smov 12
    %v5 = vld [vmem:[%s0] ss:$16 sm:%s4]
    %vm6 = vcmask 1043458
    %v7 = vsel %vm6, %v5, %v3
    %vm8 = vcmask 64512
    %9 = vst.msk [vmem:[#allocation0] ss:$8 sm:$0xf] %vm8, %v7
    %s10 = scalar_lea.vmem %s0, 15
    %s11 = smov 3
    %v12 = vld [vmem:[%s10] ss:$16 sm:%s11]
    %s13 = scalar_lea.vmem %s0, 15
    %s14 = smov 12
    %v15 = vld [vmem:[%s13] ss:$16 sm:%s14]
    %vm16 = vcmask 1043458
    %v17 = vsel %vm16, %v15, %v12
    %18 = vrot.lane.b32.xlu0 %v17, 120
    %v19 = vpop.permute.xlu0 %18
    %vm20 = vcmask 1048512
    %21 = vst.msk [vmem:[#allocation0] ss:$8 sm:$0xf] %vm20, %v19
    %s22 = scalar_lea.vmem %s0, 14
    %s23 = smov 3
    %v24 = vld [vmem:[%s22] ss:$16 sm:%s23]
    %s25 = scalar_lea.vmem %s0, 14
    %s26 = smov 12
    %v27 = vld [vmem:[%s25] ss:$16 sm:%s26]
    %vm28 = vcmask 1043458
    %v29 = vsel %vm28, %v27, %v24
    %30 = vrot.lane.b32.xlu0 %v29, 112
    %v31 = vpop.permute.xlu0 %30
    %vm32 = vcmask 982912
    %33 = vst.msk [vmem:[#allocation0] ss:$8 sm:$0xf] %vm32, %v31
    %s34 = scalar_lea.vmem %s0, 13
    %s35 = smov 3
    %v36 = vld [vmem:[%s34] ss:$16 sm:%s35]
    %s37 = scalar_lea.vmem %s0, 13
    %s38 = smov 12
    %v39 = vld [vmem:[%s37] ss:$16 sm:%s38]
    %vm40 = vcmask 1043458
    %v41 = vsel %vm40, %v39, %v36
    %42 = vrot.lane.b32.xlu0 %v41, 104
    %v43 = vpop.permute.xlu0 %42
    %vm44 = vcmask 917312
    %45 = vst.msk [vmem:[#allocation0] ss:$8 sm:$0xf] %vm44, %v43
    %s46 = scalar_lea.vmem %s0, 12
    %s47 = smov 3
    %v48 = vld [vmem:[%s46] ss:$16 sm:%s47]
    %s49 = scalar_lea.vmem %s0, 12
    %s50 = smov 12
    %v51 = vld [vmem:[%s49] ss:$16 sm:%s50]
    %vm52 = vcmask 1043458
    %v53 = vsel %vm52, %v51, %v48
    %54 = vrot.lane.b32.xlu0 %v53, 96
    %v55 = vpop.permute.xlu0 %54
    %vm56 = vcmask 851712
    %57 = vst.msk [vmem:[#allocation0] ss:$8 sm:$0xf] %vm56, %v55
    %s58 = scalar_lea.vmem %s0, 11
    %s59 = smov 3
    %v60 = vld [vmem:[%s58] ss:$16 sm:%s59]
    %s61 = scalar_lea.vmem %s0, 11
    %s62 = smov 12
    %v63 = vld [vmem:[%s61] ss:$16 sm:%s62]
    %vm64 = vcmask 1043458
    %v65 = vsel %vm64, %v63, %v60
    %66 = vrot.lane.b32.xlu0 %v65, 88
    %v67 = vpop.permute.xlu0 %66
    %vm68 = vcmask 786112
    %69 = vst.msk [vmem:[#allocation0] ss:$8 sm:$0xf] %vm68, %v67
    %s70 = scalar_lea.vmem %s0, 10
    %s71 = smov 3
    %v72 = vld [vmem:[%s70] ss:$16 sm:%s71]
    %s73 = scalar_lea.vmem %s0, 10
    %s74 = smov 12
    %v75 = vld [vmem:[%s73] ss:$16 sm:%s74]
    %vm76 = vcmask 1043458
    %v77 = vsel %vm76, %v75, %v72
    %78 = vrot.lane.b32.xlu0 %v77, 80
    %v79 = vpop.permute.xlu0 %78
    %vm80 = vcmask 720512
    %81 = vst.msk [vmem:[#allocation0] ss:$8 sm:$0xf] %vm80, %v79
    %s82 = scalar_lea.vmem %s0, 9
    %s83 = smov 3
    %v84 = vld [vmem:[%s82] ss:$16 sm:%s83]
    %s85 = scalar_lea.vmem %s0, 9
    %s86 = smov 12
    %v87 = vld [vmem:[%s85] ss:$16 sm:%s86]
    %vm88 = vcmask 1043458
    %v89 = vsel %vm88, %v87, %v84
    %90 = vrot.lane.b32.xlu0 %v89, 72
    %v91 = vpop.permute.xlu0 %90
    %vm92 = vcmask 654912
    %93 = vst.msk [vmem:[#allocation0] ss:$8 sm:$0xf] %vm92, %v91
    %s94 = scalar_lea.vmem %s0, 8
    %s95 = smov 3
    %v96 = vld [vmem:[%s94] ss:$16 sm:%s95]
    %s97 = scalar_lea.vmem %s0, 8
    %s98 = smov 12
    %v99 = vld [vmem:[%s97] ss:$16 sm:%s98]
    %vm100 = vcmask 1043458
    %v101 = vsel %vm100, %v99, %v96
    %102 = vrot.lane.b32.xlu0 %v101, 64
    %v103 = vpop.permute.xlu0 %102
    %vm104 = vcmask 589312
    %105 = vst.msk [vmem:[#allocation0] ss:$8 sm:$0xf] %vm104, %v103
    %s106 = scalar_lea.vmem %s0, 7
    %s107 = smov 3
    %v108 = vld [vmem:[%s106] ss:$16 sm:%s107]
    %s109 = scalar_lea.vmem %s0, 7
    %s110 = smov 12
    %v111 = vld [vmem:[%s109] ss:$16 sm:%s110]
    %vm112 = vcmask 1043458
    %v113 = vsel %vm112, %v111, %v108
    %114 = vrot.lane.b32.xlu0 %v113, 56
    %v115 = vpop.permute.xlu0 %114
    %vm116 = vcmask 523712
    %117 = vst.msk [vmem:[#allocation0] ss:$8 sm:$0xf] %vm116, %v115
    %s118 = scalar_lea.vmem %s0, 6
    %s119 = smov 3
    %v120 = vld [vmem:[%s118] ss:$16 sm:%s119]
    %s121 = scalar_lea.vmem %s0, 6
    %s122 = smov 12
    %v123 = vld [vmem:[%s121] ss:$16 sm:%s122]
    %vm124 = vcmask 1043458
    %v125 = vsel %vm124, %v123, %v120
    %126 = vrot.lane.b32.xlu0 %v125, 48
    %v127 = vpop.permute.xlu0 %126
    %vm128 = vcmask 458112
    %129 = vst.msk [vmem:[#allocation0] ss:$8 sm:$0xf] %vm128, %v127
    %s130 = scalar_lea.vmem %s0, 5
    %s131 = smov 3
    %v132 = vld [vmem:[%s130] ss:$16 sm:%s131]
    %s133 = scalar_lea.vmem %s0, 5
    %s134 = smov 12
    %v135 = vld [vmem:[%s133] ss:$16 sm:%s134]
    %vm136 = vcmask 1043458
    %v137 = vsel %vm136, %v135, %v132
    %138 = vrot.lane.b32.xlu0 %v137, 40
    %v139 = vpop.permute.xlu0 %138
    %vm140 = vcmask 392512
    %141 = vst.msk [vmem:[#allocation0] ss:$8 sm:$0xf] %vm140, %v139
    %s142 = scalar_lea.vmem %s0, 4
    %s143 = smov 3
    %v144 = vld [vmem:[%s142] ss:$16 sm:%s143]
    %s145 = scalar_lea.vmem %s0, 4
    %s146 = smov 12
    %v147 = vld [vmem:[%s145] ss:$16 sm:%s146]
    %vm148 = vcmask 1043458
    %v149 = vsel %vm148, %v147, %v144
    %150 = vrot.lane.b32.xlu0 %v149, 32
    %v151 = vpop.permute.xlu0 %150
    %vm152 = vcmask 326912
    %153 = vst.msk [vmem:[#allocation0] ss:$8 sm:$0xf] %vm152, %v151
    %s154 = scalar_lea.vmem %s0, 3
    %s155 = smov 3
    %v156 = vld [vmem:[%s154] ss:$16 sm:%s155]
    %s157 = scalar_lea.vmem %s0, 3
    %s158 = smov 12
    %v159 = vld [vmem:[%s157] ss:$16 sm:%s158]
    %vm160 = vcmask 1043458
    %v161 = vsel %vm160, %v159, %v156
    %162 = vrot.lane.b32.xlu0 %v161, 24
    %v163 = vpop.permute.xlu0 %162
    %vm164 = vcmask 261312
    %165 = vst.msk [vmem:[#allocation0] ss:$8 sm:$0xf] %vm164, %v163
    %s166 = scalar_lea.vmem %s0, 2
    %s167 = smov 3
    %v168 = vld [vmem:[%s166] ss:$16 sm:%s167]
    %s169 = scalar_lea.vmem %s0, 2
    %s170 = smov 12
    %v171 = vld [vmem:[%s169] ss:$16 sm:%s170]
    %vm172 = vcmask 1043458
    %v173 = vsel %vm172, %v171, %v168
    %174 = vrot.lane.b32.xlu0 %v173, 16
    %v175 = vpop.permute.xlu0 %174
    %vm176 = vcmask 195712
    %177 = vst.msk [vmem:[#allocation0] ss:$8 sm:$0xf] %vm176, %v175
    %s178 = scalar_lea.vmem %s0, 1
    %s179 = smov 3
    %v180 = vld [vmem:[%s178] ss:$16 sm:%s179]
    %s181 = scalar_lea.vmem %s0, 1
    %s182 = smov 12
    %v183 = vld [vmem:[%s181] ss:$16 sm:%s182]
    %vm184 = vcmask 1043458
    %v185 = vsel %vm184, %v183, %v180
    %186 = vrot.lane.b32.xlu0 %v185, 8
    %v187 = vpop.permute.xlu0 %186
    %vm188 = vcmask 130112
    %189 = vst.msk [vmem:[#allocation0] ss:$8 sm:$0xf] %vm188, %v187
    %s191 = sshllo.u32 0, 1
    %v193 = vld [vmem:[#allocation0] sm:%s191]
    %s194 = sshllo.u32 0, 1
    %195 = vst [vmem:[%s1] sm:%s194] %v193
    %s196 = scalar_lea.vmem [#allocation0], 8
    %v197 = vld [vmem:[%s196] sm:%s191]
    %s198 = sshllo.u32 0, 1
    %s199 = scalar_lea.vmem %s1, 1
    %200 = vst [vmem:[%s199] sm:%s198] %v197
    %s201 = scalar_lea.vmem [#allocation0], 16
    %v202 = vld [vmem:[%s201] sm:%s191]
    %s203 = sshllo.u32 0, 1
    %s204 = smul.addr 1, 2
    %s205 = scalar_lea.vmem %s1, %s204
    %206 = vst [vmem:[%s205] sm:%s203] %v202
    %s207 = scalar_lea.vmem [#allocation0], 24
    %v208 = vld [vmem:[%s207] sm:%s191]
    %s209 = sshllo.u32 0, 1
    %s210 = smul.addr 1, 3
    %s211 = scalar_lea.vmem %s1, %s210
    %212 = vst [vmem:[%s211] sm:%s209] %v208

// kernel: resize_conv_forward.1
$region0: #{resize_conv_forward.1}
  #allocation0 [shape = 'u32[]', space=smem, size = 0x4, offset = 0x4, fixed_abs, tag = 'smem constant byte address 0x4 - core index']
  #allocation1 [shape = 'u32[144,128]{1,0:T(1,128)}', space=vmem, size = 0x12000, scoped, tag = 'internal scratch']
  %s0 = inlined_call_operand.vmem [shape: bf16[1,16,8,384], index: 0, kind: input, shape index: {}]
  %s1 = inlined_call_operand.vmem [shape: bf16[384,512], index: 1, kind: input, shape index: {}]
  %s2 = inlined_call_operand.vmem [shape: f32[1,512], index: 2, kind: input, shape index: {}]
  %s3 = inlined_call_operand.vmem [shape: f32[1,16,8,512], index: 3, kind: output, shape index: {}]
  %s4 = sld [smem:[#allocation0]]
  $region22: #{resize_conv_forward.1} parent=0
    _
  %s6 = ssub.s32 1, %s4
  %s7 = scalar_select 0, %s6, %s4
  // Predicated region
  $region2: #{resize_conv_forward.1} parent=0 // pred_check
    _
  $region3: #{resize_conv_forward.1} parent=0 // pred_check_branch
    %9 = sbr.rel (0) target = $region5
  $region4: #{resize_conv_forward.1} parent=0 // pred_region
    _
  $region5: #{resize_conv_forward.1} parent=0 // pred_fallthru
    _
  // Predicated region
  $region6: #{resize_conv_forward.1} parent=0 // pred_check
    _
  $region7: #{resize_conv_forward.1} parent=0 // pred_check_branch
    %11 = sbr.rel (0) target = $region9
  $region8: #{resize_conv_forward.1} parent=0 // pred_region
    _
  $region9: #{resize_conv_forward.1} parent=0 // pred_fallthru
    _
  // Predicated region
  $region10: #{resize_conv_forward.1} parent=0 // pred_check
    _
  $region11: #{resize_conv_forward.1} parent=0 // pred_check_branch
    %13 = sbr.rel (0) target = $region13
  $region12: #{resize_conv_forward.1} parent=0 // pred_region
    _
  $region13: #{resize_conv_forward.1} parent=0 // pred_fallthru
    _
  %v15 = vld [vmem:[%s0] sm:$0xff]
  %v16 = vld [vmem:[%s0 + $0x8] sm:$0xf]
  %v17 = vld [vmem:[%s0 + $0xc] sm:$0xff]
  %v18 = vld [vmem:[%s0 + $0x14] sm:$0xf]
  %v19 = vld [vmem:[%s0 + $0x18] sm:$0xff]
  %v20 = vld [vmem:[%s0 + $0x20] sm:$0xf]
  %v21 = vld [vmem:[%s0 + $0x24] sm:$0xff]
  %v22 = vld [vmem:[%s0 + $0x2c] sm:$0xf]
  %v23 = vld [vmem:[%s0 + $0x30] sm:$0xff]
  %v24 = vld [vmem:[%s0 + $0x38] sm:$0xf]
  %v25 = vld [vmem:[%s0 + $0x3c] sm:$0xff]
  %v26 = vld [vmem:[%s0 + $0x44] sm:$0xf]
  %v27 = vld [vmem:[%s0 + $0x48] sm:$0xff]
  %v28 = vld [vmem:[%s0 + $0x50] sm:$0xf]
  %v29 = vld [vmem:[%s0 + $0x54] sm:$0xff]
  %v30 = vld [vmem:[%s0 + $0x5c] sm:$0xf]
  %v31 = vld [vmem:[%s0 + $0x60] sm:$0xff]
  %v32 = vld [vmem:[%s0 + $0x68] sm:$0xf]
  %v33 = vld [vmem:[%s0 + $0x6c] sm:$0xff]
  %v34 = vld [vmem:[%s0 + $0x74] sm:$0xf]
  %v35 = vld [vmem:[%s0 + $0x78] sm:$0xff]
  %v36 = vld [vmem:[%s0 + $0x80] sm:$0xf]
  %v37 = vld [vmem:[%s0 + $0x84] sm:$0xff]
  %v38 = vld [vmem:[%s0 + $0x8c] sm:$0xf]
  %v39 = vld [vmem:[%s0 + $0x90] sm:$0xff]
  %v40 = vld [vmem:[%s0 + $0x98] sm:$0xf]
  %v41 = vld [vmem:[%s0 + $0x9c] sm:$0xff]
  %v42 = vld [vmem:[%s0 + $0xa4] sm:$0xf]
  %v43 = vld [vmem:[%s0 + $0xa8] sm:$0xff]
  %v44 = vld [vmem:[%s0 + $0xb0] sm:$0xf]
  %v45 = vld [vmem:[%s0 + $0xb4] sm:$0xff]
  %v46 = vld [vmem:[%s0 + $0xbc] sm:$0xf]
  %v47 = vld [vmem:[%s1] sm:$0xff]
  %v48 = vld [vmem:[%s1 + $0x8] sm:$0xff]
  %v49 = vld [vmem:[%s1 + $0x10] sm:$0xff]
  %v50 = vld [vmem:[%s1 + $0x18] sm:$0xff]
  %v51 = vld [vmem:[%s1 + $0x20] sm:$0xff]
  %v52 = vld [vmem:[%s1 + $0x28] sm:$0xff]
  %v53 = vld [vmem:[%s1 + $0x30] sm:$0xff]
  %v54 = vld [vmem:[%s1 + $0x38] sm:$0xff]
  %v55 = vld [vmem:[%s1 + $0x40] sm:$0xff]
  %v56 = vld [vmem:[%s1 + $0x48] sm:$0xff]
  %v57 = vld [vmem:[%s1 + $0x50] sm:$0xff]
  %v58 = vld [vmem:[%s1 + $0x58] sm:$0xff]
  %v59 = vld [vmem:[%s1 + $0x60] sm:$0xff]
  %v60 = vld [vmem:[%s1 + $0x68] sm:$0xff]
  %v61 = vld [vmem:[%s1 + $0x70] sm:$0xff]
  %v62 = vld [vmem:[%s1 + $0x78] sm:$0xff]
  %v63 = vld [vmem:[%s1 + $0x80] sm:$0xff]
  %v64 = vld [vmem:[%s1 + $0x88] sm:$0xff]
  %v65 = vld [vmem:[%s1 + $0x90] sm:$0xff]
  %v66 = vld [vmem:[%s1 + $0x98] sm:$0xff]
  %v67 = vld [vmem:[%s1 + $0xa0] sm:$0xff]
  %v68 = vld [vmem:[%s1 + $0xa8] sm:$0xff]
  %v69 = vld [vmem:[%s1 + $0xb0] sm:$0xff]
  %v70 = vld [vmem:[%s1 + $0xb8] sm:$0xff]
  %v71 = vld [vmem:[%s1 + $0xc0] sm:$0xff]
  %v72 = vld [vmem:[%s1 + $0xc8] sm:$0xff]
  %v73 = vld [vmem:[%s1 + $0xd0] sm:$0xff]
  %v74 = vld [vmem:[%s1 + $0xd8] sm:$0xff]
  %v75 = vld [vmem:[%s1 + $0xe0] sm:$0xff]
  %v76 = vld [vmem:[%s1 + $0xe8] sm:$0xff]
  %v77 = vld [vmem:[%s1 + $0xf0] sm:$0xff]
  %v78 = vld [vmem:[%s1 + $0xf8] sm:$0xff]
  %v79 = vld [vmem:[%s1 + $0x100] sm:$0xff]
  %v80 = vld [vmem:[%s1 + $0x108] sm:$0xff]
  %v81 = vld [vmem:[%s1 + $0x110] sm:$0xff]
  %v82 = vld [vmem:[%s1 + $0x118] sm:$0xff]
  %v83 = vld [vmem:[%s1 + $0x120] sm:$0xff]
  %v84 = vld [vmem:[%s1 + $0x128] sm:$0xff]
  %v85 = vld [vmem:[%s1 + $0x130] sm:$0xff]
  %v86 = vld [vmem:[%s1 + $0x138] sm:$0xff]
  %v87 = vld [vmem:[%s1 + $0x140] sm:$0xff]
  %v88 = vld [vmem:[%s1 + $0x148] sm:$0xff]
  %v89 = vld [vmem:[%s1 + $0x150] sm:$0xff]
  %v90 = vld [vmem:[%s1 + $0x158] sm:$0xff]
  %v91 = vld [vmem:[%s1 + $0x160] sm:$0xff]
  %v92 = vld [vmem:[%s1 + $0x168] sm:$0xff]
  %v93 = vld [vmem:[%s1 + $0x170] sm:$0xff]
  %v94 = vld [vmem:[%s1 + $0x178] sm:$0xff]
  %v95 = vld [vmem:[%s1 + $0x180] sm:$0xff]
  %v96 = vld [vmem:[%s1 + $0x188] sm:$0xff]
  %v97 = vld [vmem:[%s1 + $0x190] sm:$0xff]
  %v98 = vld [vmem:[%s1 + $0x198] sm:$0xff]
  %v99 = vld [vmem:[%s1 + $0x1a0] sm:$0xff]
  %v100 = vld [vmem:[%s1 + $0x1a8] sm:$0xff]
  %v101 = vld [vmem:[%s1 + $0x1b0] sm:$0xff]
  %v102 = vld [vmem:[%s1 + $0x1b8] sm:$0xff]
  %v103 = vld [vmem:[%s1 + $0x1c0] sm:$0xff]
  %v104 = vld [vmem:[%s1 + $0x1c8] sm:$0xff]
  %v105 = vld [vmem:[%s1 + $0x1d0] sm:$0xff]
  %v106 = vld [vmem:[%s1 + $0x1d8] sm:$0xff]
  %v107 = vld [vmem:[%s1 + $0x1e0] sm:$0xff]
  %v108 = vld [vmem:[%s1 + $0x1e8] sm:$0xff]
  %v109 = vld [vmem:[%s1 + $0x1f0] sm:$0xff]
  %v110 = vld [vmem:[%s1 + $0x1f8] sm:$0xff]
  %v111 = vld [vmem:[%s1 + $0x200] sm:$0xff]
  %v112 = vld [vmem:[%s1 + $0x208] sm:$0xff]
  %v113 = vld [vmem:[%s1 + $0x210] sm:$0xff]
  %v114 = vld [vmem:[%s1 + $0x218] sm:$0xff]
  %v115 = vld [vmem:[%s1 + $0x220] sm:$0xff]
  %v116 = vld [vmem:[%s1 + $0x228] sm:$0xff]
  %v117 = vld [vmem:[%s1 + $0x230] sm:$0xff]
  %v118 = vld [vmem:[%s1 + $0x238] sm:$0xff]
  %v119 = vld [vmem:[%s1 + $0x240] sm:$0xff]
  %v120 = vld [vmem:[%s1 + $0x248] sm:$0xff]
  %v121 = vld [vmem:[%s1 + $0x250] sm:$0xff]
  %v122 = vld [vmem:[%s1 + $0x258] sm:$0xff]
  %v123 = vld [vmem:[%s1 + $0x260] sm:$0xff]
  %v124 = vld [vmem:[%s1 + $0x268] sm:$0xff]
  %v125 = vld [vmem:[%s1 + $0x270] sm:$0xff]
  %v126 = vld [vmem:[%s1 + $0x278] sm:$0xff]
  %v127 = vld [vmem:[%s1 + $0x280] sm:$0xff]
  %v128 = vld [vmem:[%s1 + $0x288] sm:$0xff]
  %v129 = vld [vmem:[%s1 + $0x290] sm:$0xff]
  %v130 = vld [vmem:[%s1 + $0x298] sm:$0xff]
  %v131 = vld [vmem:[%s1 + $0x2a0] sm:$0xff]
  %v132 = vld [vmem:[%s1 + $0x2a8] sm:$0xff]
  %v133 = vld [vmem:[%s1 + $0x2b0] sm:$0xff]
  %v134 = vld [vmem:[%s1 + $0x2b8] sm:$0xff]
  %v135 = vld [vmem:[%s1 + $0x2c0] sm:$0xff]
  %v136 = vld [vmem:[%s1 + $0x2c8] sm:$0xff]
  %v137 = vld [vmem:[%s1 + $0x2d0] sm:$0xff]
  %v138 = vld [vmem:[%s1 + $0x2d8] sm:$0xff]
  %v139 = vld [vmem:[%s1 + $0x2e0] sm:$0xff]
  %v140 = vld [vmem:[%s1 + $0x2e8] sm:$0xff]
  %v141 = vld [vmem:[%s1 + $0x2f0] sm:$0xff]
  %v142 = vld [vmem:[%s1 + $0x2f8] sm:$0xff]
  %v143 = vld [vmem:[%s2] sm:$0xf]
  %v145 = vlaneseq
  %v146 = vshrl.u32 %v145, 7
  %v147 = vsub.s32 0, %v146
  %v148 = vrot.slane %v143, %v147
  %v149 = vlaneseq
  %v150 = vshrl.u32 %v149, 7
  %v151 = vsub.s32 1, %v150
  %v152 = vrot.slane %v143, %v151
  %v153 = vlaneseq
  %v154 = vshrl.u32 %v153, 7
  %v155 = vsub.s32 2, %v154
  %v156 = vrot.slane %v143, %v155
  %v157 = vlaneseq
  %v158 = vshrl.u32 %v157, 7
  %v159 = vsub.s32 3, %v158
  %v160 = vrot.slane %v143, %v159
  %v197 = vunpack.c.l.b16 %v15
  %v198 = vunpack.c.h.b16 %v15
  %v199 = vunpack.c.l.b16 %v16
  %v200 = vunpack.c.l.b16 %v17
  %v201 = vunpack.c.h.b16 %v17
  %v202 = vunpack.c.l.b16 %v18
  %v203 = vunpack.c.l.b16 %v19
  %v204 = vunpack.c.h.b16 %v19
  %v205 = vunpack.c.l.b16 %v20
  %v206 = vunpack.c.l.b16 %v21
  %v207 = vunpack.c.h.b16 %v21
  %v208 = vunpack.c.l.b16 %v22
  %v209 = vunpack.c.l.b16 %v23
  %v210 = vunpack.c.h.b16 %v23
  %v211 = vunpack.c.l.b16 %v24
  %v212 = vunpack.c.l.b16 %v25
  %v213 = vunpack.c.h.b16 %v25
  %v214 = vunpack.c.l.b16 %v26
  %v215 = vunpack.c.l.b16 %v27
  %v216 = vunpack.c.h.b16 %v27
  %v217 = vunpack.c.l.b16 %v28
  %v218 = vunpack.c.l.b16 %v29
  %v219 = vunpack.c.h.b16 %v29
  %v220 = vunpack.c.l.b16 %v30
  %v221 = vunpack.c.l.b16 %v31
  %v222 = vunpack.c.h.b16 %v31
  %v223 = vunpack.c.l.b16 %v32
  %v224 = vunpack.c.l.b16 %v33
  %v225 = vunpack.c.h.b16 %v33
  %v226 = vunpack.c.l.b16 %v34
  %v227 = vunpack.c.l.b16 %v35
  %v228 = vunpack.c.h.b16 %v35
  %v229 = vunpack.c.l.b16 %v36
  %v230 = vunpack.c.l.b16 %v37
  %v231 = vunpack.c.h.b16 %v37
  %v232 = vunpack.c.l.b16 %v38
  %v233 = vunpack.c.l.b16 %v39
  %v234 = vunpack.c.h.b16 %v39
  %v235 = vunpack.c.l.b16 %v40
  %v236 = vunpack.c.l.b16 %v41
  %v237 = vunpack.c.h.b16 %v41
  %v238 = vunpack.c.l.b16 %v42
  %v239 = vunpack.c.l.b16 %v43
  %v240 = vunpack.c.h.b16 %v43
  %v241 = vunpack.c.l.b16 %v44
  %v242 = vunpack.c.l.b16 %v45
  %v243 = vunpack.c.h.b16 %v45
  %v244 = vunpack.c.l.b16 %v46
  %v245 = vpack.c.b16 %v200, %v197
  %v246 = vpack.c.b16 %v201, %v198
  %v247 = vpack.c.b16 %v202, %v199
  %v248 = vpack.c.b16 %v206, %v203
  %v249 = vpack.c.b16 %v207, %v204
  %v250 = vpack.c.b16 %v208, %v205
  %v251 = vpack.c.b16 %v212, %v209
  %v252 = vpack.c.b16 %v213, %v210
  %v253 = vpack.c.b16 %v214, %v211
  %v254 = vpack.c.b16 %v218, %v215
  %v255 = vpack.c.b16 %v219, %v216
  %v256 = vpack.c.b16 %v220, %v217
  %v257 = vpack.c.b16 %v224, %v221
  %v258 = vpack.c.b16 %v225, %v222
  %v259 = vpack.c.b16 %v226, %v223
  %v260 = vpack.c.b16 %v230, %v227
  %v261 = vpack.c.b16 %v231, %v228
  %v262 = vpack.c.b16 %v232, %v229
  %v263 = vpack.c.b16 %v236, %v233
  %v264 = vpack.c.b16 %v237, %v234
  %v265 = vpack.c.b16 %v238, %v235
  %v266 = vpack.c.b16 %v242, %v239
  %v267 = vpack.c.b16 %v243, %v240
  %v268 = vpack.c.b16 %v244, %v241
  %v389 = vunpack.c.l.b16 %v47
  %v390 = vunpack.c.h.b16 %v47
  %v391 = vunpack.c.l.b16 %v48
  %v392 = vunpack.c.h.b16 %v48
  %v393 = vunpack.c.l.b16 %v49
  %v394 = vunpack.c.h.b16 %v49
  %v395 = vunpack.c.l.b16 %v50
  %v396 = vunpack.c.h.b16 %v50
  %v397 = vunpack.c.l.b16 %v51
  %v398 = vunpack.c.h.b16 %v51
  %v399 = vunpack.c.l.b16 %v52
  %v400 = vunpack.c.h.b16 %v52
  %v401 = vunpack.c.l.b16 %v53
  %v402 = vunpack.c.h.b16 %v53
  %v403 = vunpack.c.l.b16 %v54
  %v404 = vunpack.c.h.b16 %v54
  %v405 = vunpack.c.l.b16 %v55
  %v406 = vunpack.c.h.b16 %v55
  %v407 = vunpack.c.l.b16 %v56
  %v408 = vunpack.c.h.b16 %v56
  %v409 = vunpack.c.l.b16 %v57
  %v410 = vunpack.c.h.b16 %v57
  %v411 = vunpack.c.l.b16 %v58
  %v412 = vunpack.c.h.b16 %v58
  %v413 = vunpack.c.l.b16 %v59
  %v414 = vunpack.c.h.b16 %v59
  %v415 = vunpack.c.l.b16 %v60
  %v416 = vunpack.c.h.b16 %v60
  %v417 = vunpack.c.l.b16 %v61
  %v418 = vunpack.c.h.b16 %v61
  %v419 = vunpack.c.l.b16 %v62
  %v420 = vunpack.c.h.b16 %v62
  %v421 = vunpack.c.l.b16 %v63
  %v422 = vunpack.c.h.b16 %v63
  %v423 = vunpack.c.l.b16 %v64
  %v424 = vunpack.c.h.b16 %v64
  %v425 = vunpack.c.l.b16 %v65
  %v426 = vunpack.c.h.b16 %v65
  %v427 = vunpack.c.l.b16 %v66
  %v428 = vunpack.c.h.b16 %v66
  %v429 = vunpack.c.l.b16 %v67
  %v430 = vunpack.c.h.b16 %v67
  %v431 = vunpack.c.l.b16 %v68
  %v432 = vunpack.c.h.b16 %v68
  %v433 = vunpack.c.l.b16 %v69
  %v434 = vunpack.c.h.b16 %v69
  %v435 = vunpack.c.l.b16 %v70
  %v436 = vunpack.c.h.b16 %v70
  %v437 = vunpack.c.l.b16 %v71
  %v438 = vunpack.c.h.b16 %v71
  %v439 = vunpack.c.l.b16 %v72
  %v440 = vunpack.c.h.b16 %v72
  %v441 = vunpack.c.l.b16 %v73
  %v442 = vunpack.c.h.b16 %v73
  %v443 = vunpack.c.l.b16 %v74
  %v444 = vunpack.c.h.b16 %v74
  %v445 = vunpack.c.l.b16 %v75
  %v446 = vunpack.c.h.b16 %v75
  %v447 = vunpack.c.l.b16 %v76
  %v448 = vunpack.c.h.b16 %v76
  %v449 = vunpack.c.l.b16 %v77
  %v450 = vunpack.c.h.b16 %v77
  %v451 = vunpack.c.l.b16 %v78
  %v452 = vunpack.c.h.b16 %v78
  %v453 = vunpack.c.l.b16 %v79
  %v454 = vunpack.c.h.b16 %v79
  %v455 = vunpack.c.l.b16 %v80
  %v456 = vunpack.c.h.b16 %v80
  %v457 = vunpack.c.l.b16 %v81
  %v458 = vunpack.c.h.b16 %v81
  %v459 = vunpack.c.l.b16 %v82
  %v460 = vunpack.c.h.b16 %v82
  %v461 = vunpack.c.l.b16 %v83
  %v462 = vunpack.c.h.b16 %v83
  %v463 = vunpack.c.l.b16 %v84
  %v464 = vunpack.c.h.b16 %v84
  %v465 = vunpack.c.l.b16 %v85
  %v466 = vunpack.c.h.b16 %v85
  %v467 = vunpack.c.l.b16 %v86
  %v468 = vunpack.c.h.b16 %v86
  %v469 = vunpack.c.l.b16 %v87
  %v470 = vunpack.c.h.b16 %v87
  %v471 = vunpack.c.l.b16 %v88
  %v472 = vunpack.c.h.b16 %v88
  %v473 = vunpack.c.l.b16 %v89
  %v474 = vunpack.c.h.b16 %v89
  %v475 = vunpack.c.l.b16 %v90
  %v476 = vunpack.c.h.b16 %v90
  %v477 = vunpack.c.l.b16 %v91
  %v478 = vunpack.c.h.b16 %v91
  %v479 = vunpack.c.l.b16 %v92
  %v480 = vunpack.c.h.b16 %v92
  %v481 = vunpack.c.l.b16 %v93
  %v482 = vunpack.c.h.b16 %v93
  %v483 = vunpack.c.l.b16 %v94
  %v484 = vunpack.c.h.b16 %v94
  %v485 = vunpack.c.l.b16 %v95
  %v486 = vunpack.c.h.b16 %v95
  %v487 = vunpack.c.l.b16 %v96
  %v488 = vunpack.c.h.b16 %v96
  %v489 = vunpack.c.l.b16 %v97
  %v490 = vunpack.c.h.b16 %v97
  %v491 = vunpack.c.l.b16 %v98
  %v492 = vunpack.c.h.b16 %v98
  %v493 = vunpack.c.l.b16 %v99
  %v494 = vunpack.c.h.b16 %v99
  %v495 = vunpack.c.l.b16 %v100
  %v496 = vunpack.c.h.b16 %v100
  %v497 = vunpack.c.l.b16 %v101
  %v498 = vunpack.c.h.b16 %v101
  %v499 = vunpack.c.l.b16 %v102
  %v500 = vunpack.c.h.b16 %v102
  %v501 = vunpack.c.l.b16 %v103
  %v502 = vunpack.c.h.b16 %v103
  %v503 = vunpack.c.l.b16 %v104
  %v504 = vunpack.c.h.b16 %v104
  %v505 = vunpack.c.l.b16 %v105
  %v506 = vunpack.c.h.b16 %v105
  %v507 = vunpack.c.l.b16 %v106
  %v508 = vunpack.c.h.b16 %v106
  %v509 = vunpack.c.l.b16 %v107
  %v510 = vunpack.c.h.b16 %v107
  %v511 = vunpack.c.l.b16 %v108
  %v512 = vunpack.c.h.b16 %v108
  %v513 = vunpack.c.l.b16 %v109
  %v514 = vunpack.c.h.b16 %v109
  %v515 = vunpack.c.l.b16 %v110
  %v516 = vunpack.c.h.b16 %v110
  %v517 = vunpack.c.l.b16 %v111
  %v518 = vunpack.c.h.b16 %v111
  %v519 = vunpack.c.l.b16 %v112
  %v520 = vunpack.c.h.b16 %v112
  %v521 = vunpack.c.l.b16 %v113
  %v522 = vunpack.c.h.b16 %v113
  %v523 = vunpack.c.l.b16 %v114
  %v524 = vunpack.c.h.b16 %v114
  %v525 = vunpack.c.l.b16 %v115
  %v526 = vunpack.c.h.b16 %v115
  %v527 = vunpack.c.l.b16 %v116
  %v528 = vunpack.c.h.b16 %v116
  %v529 = vunpack.c.l.b16 %v117
  %v530 = vunpack.c.h.b16 %v117
  %v531 = vunpack.c.l.b16 %v118
  %v532 = vunpack.c.h.b16 %v118
  %v533 = vunpack.c.l.b16 %v119
  %v534 = vunpack.c.h.b16 %v119
  %v535 = vunpack.c.l.b16 %v120
  %v536 = vunpack.c.h.b16 %v120
  %v537 = vunpack.c.l.b16 %v121
  %v538 = vunpack.c.h.b16 %v121
  %v539 = vunpack.c.l.b16 %v122
  %v540 = vunpack.c.h.b16 %v122
  %v541 = vunpack.c.l.b16 %v123
  %v542 = vunpack.c.h.b16 %v123
  %v543 = vunpack.c.l.b16 %v124
  %v544 = vunpack.c.h.b16 %v124
  %v545 = vunpack.c.l.b16 %v125
  %v546 = vunpack.c.h.b16 %v125
  %v547 = vunpack.c.l.b16 %v126
  %v548 = vunpack.c.h.b16 %v126
  %v549 = vunpack.c.l.b16 %v127
  %v550 = vunpack.c.h.b16 %v127
  %v551 = vunpack.c.l.b16 %v128
  %v552 = vunpack.c.h.b16 %v128
  %v553 = vunpack.c.l.b16 %v129
  %v554 = vunpack.c.h.b16 %v129
  %v555 = vunpack.c.l.b16 %v130
  %v556 = vunpack.c.h.b16 %v130
  %v557 = vunpack.c.l.b16 %v131
  %v558 = vunpack.c.h.b16 %v131
  %v559 = vunpack.c.l.b16 %v132
  %v560 = vunpack.c.h.b16 %v132
  %v561 = vunpack.c.l.b16 %v133
  %v562 = vunpack.c.h.b16 %v133
  %v563 = vunpack.c.l.b16 %v134
  %v564 = vunpack.c.h.b16 %v134
  %v565 = vunpack.c.l.b16 %v135
  %v566 = vunpack.c.h.b16 %v135
  %v567 = vunpack.c.l.b16 %v136
  %v568 = vunpack.c.h.b16 %v136
  %v569 = vunpack.c.l.b16 %v137
  %v570 = vunpack.c.h.b16 %v137
  %v571 = vunpack.c.l.b16 %v138
  %v572 = vunpack.c.h.b16 %v138
  %v573 = vunpack.c.l.b16 %v139
  %v574 = vunpack.c.h.b16 %v139
  %v575 = vunpack.c.l.b16 %v140
  %v576 = vunpack.c.h.b16 %v140
  %v577 = vunpack.c.l.b16 %v141
  %v578 = vunpack.c.h.b16 %v141
  %v579 = vunpack.c.l.b16 %v142
  %v580 = vunpack.c.h.b16 %v142
  %v581 = vpack.c.b16 %v393, %v389
  %v582 = vpack.c.b16 %v394, %v390
  %v583 = vpack.c.b16 %v395, %v391
  %v584 = vpack.c.b16 %v396, %v392
  %v585 = vpack.c.b16 %v401, %v397
  %v586 = vpack.c.b16 %v402, %v398
  %v587 = vpack.c.b16 %v403, %v399
  %v588 = vpack.c.b16 %v404, %v400
  %v589 = vpack.c.b16 %v409, %v405
  %v590 = vpack.c.b16 %v410, %v406
  %v591 = vpack.c.b16 %v411, %v407
  %v592 = vpack.c.b16 %v412, %v408
  %v593 = vpack.c.b16 %v417, %v413
  %v594 = vpack.c.b16 %v418, %v414
  %v595 = vpack.c.b16 %v419, %v415
  %v596 = vpack.c.b16 %v420, %v416
  %v597 = vpack.c.b16 %v425, %v421
  %v598 = vpack.c.b16 %v426, %v422
  %v599 = vpack.c.b16 %v427, %v423
  %v600 = vpack.c.b16 %v428, %v424
  %v601 = vpack.c.b16 %v433, %v429
  %v602 = vpack.c.b16 %v434, %v430
  %v603 = vpack.c.b16 %v435, %v431
  %v604 = vpack.c.b16 %v436, %v432
  %v605 = vpack.c.b16 %v441, %v437
  %v606 = vpack.c.b16 %v442, %v438
  %v607 = vpack.c.b16 %v443, %v439
  %v608 = vpack.c.b16 %v444, %v440
  %v609 = vpack.c.b16 %v449, %v445
  %v610 = vpack.c.b16 %v450, %v446
  %v611 = vpack.c.b16 %v451, %v447
  %v612 = vpack.c.b16 %v452, %v448
  %v613 = vpack.c.b16 %v457, %v453
  %v614 = vpack.c.b16 %v458, %v454
  %v615 = vpack.c.b16 %v459, %v455
  %v616 = vpack.c.b16 %v460, %v456
  %v617 = vpack.c.b16 %v465, %v461
  %v618 = vpack.c.b16 %v466, %v462
  %v619 = vpack.c.b16 %v467, %v463
  %v620 = vpack.c.b16 %v468, %v464
  %v621 = vpack.c.b16 %v473, %v469
  %v622 = vpack.c.b16 %v474, %v470
  %v623 = vpack.c.b16 %v475, %v471
  %v624 = vpack.c.b16 %v476, %v472
  %v625 = vpack.c.b16 %v481, %v477
  %v626 = vpack.c.b16 %v482, %v478
  %v627 = vpack.c.b16 %v483, %v479
  %v628 = vpack.c.b16 %v484, %v480
  %v629 = vpack.c.b16 %v489, %v485
  %v630 = vpack.c.b16 %v490, %v486
  %v631 = vpack.c.b16 %v491, %v487
  %v632 = vpack.c.b16 %v492, %v488
  %v633 = vpack.c.b16 %v497, %v493
  %v634 = vpack.c.b16 %v498, %v494
  %v635 = vpack.c.b16 %v499, %v495
  %v636 = vpack.c.b16 %v500, %v496
  %v637 = vpack.c.b16 %v505, %v501
  %v638 = vpack.c.b16 %v506, %v502
  %v639 = vpack.c.b16 %v507, %v503
  %v640 = vpack.c.b16 %v508, %v504
  %v641 = vpack.c.b16 %v513, %v509
  %v642 = vpack.c.b16 %v514, %v510
  %v643 = vpack.c.b16 %v515, %v511
  %v644 = vpack.c.b16 %v516, %v512
  %v645 = vpack.c.b16 %v521, %v517
  %v646 = vpack.c.b16 %v522, %v518
  %v647 = vpack.c.b16 %v523, %v519
  %v648 = vpack.c.b16 %v524, %v520
  %v649 = vpack.c.b16 %v529, %v525
  %v650 = vpack.c.b16 %v530, %v526
  %v651 = vpack.c.b16 %v531, %v527
  %v652 = vpack.c.b16 %v532, %v528
  %v653 = vpack.c.b16 %v537, %v533
  %v654 = vpack.c.b16 %v538, %v534
  %v655 = vpack.c.b16 %v539, %v535
  %v656 = vpack.c.b16 %v540, %v536
  %v657 = vpack.c.b16 %v545, %v541
  %v658 = vpack.c.b16 %v546, %v542
  %v659 = vpack.c.b16 %v547, %v543
  %v660 = vpack.c.b16 %v548, %v544
  %v661 = vpack.c.b16 %v553, %v549
  %v662 = vpack.c.b16 %v554, %v550
  %v663 = vpack.c.b16 %v555, %v551
  %v664 = vpack.c.b16 %v556, %v552
  %v665 = vpack.c.b16 %v561, %v557
  %v666 = vpack.c.b16 %v562, %v558
  %v667 = vpack.c.b16 %v563, %v559
  %v668 = vpack.c.b16 %v564, %v560
  %v669 = vpack.c.b16 %v569, %v565
  %v670 = vpack.c.b16 %v570, %v566
  %v671 = vpack.c.b16 %v571, %v567
  %v672 = vpack.c.b16 %v572, %v568
  %v673 = vpack.c.b16 %v577, %v573
  %v674 = vpack.c.b16 %v578, %v574
  %v675 = vpack.c.b16 %v579, %v575
  %v676 = vpack.c.b16 %v580, %v576
  %773 = vmatprep.subr.bf16.mxu0 %v582
  %774 = vmatpush1.bf16.msra.mxu0 %v581
  %775 = vmatprep.subr.bf16.mxu0 %v586
  %776 = vmatpush1.bf16.msra.mxu0 %v585
  %777 = vmatprep.subr.bf16.mxu0 %v590
  %778 = vmatpush1.bf16.msra.mxu0 %v589
  %779 = vmatprep.subr.bf16.mxu0 %v594
  %780 = vmatpush1.bf16.msra.mxu0 %v593
  %781 = vmatprep.subr.bf16.mxu0 %v598
  %782 = vmatpush1.bf16.msra.mxu0 %v597
  %783 = vmatprep.subr.bf16.mxu0 %v602
  %784 = vmatpush1.bf16.msra.mxu0 %v601
  %785 = vmatprep.subr.bf16.mxu0 %v606
  %786 = vmatpush1.bf16.msra.mxu0 %v605
  %787 = vmatprep.subr.bf16.mxu0 %v610
  %788 = vmatpush1.bf16.msra.mxu0 %v609
  %789 = vmatprep.subr.bf16.mxu0 %v614
  %790 = vmatpush1.bf16.msra.mxu0 %v613
  %791 = vmatprep.subr.bf16.mxu0 %v618
  %792 = vmatpush1.bf16.msra.mxu0 %v617
  %793 = vmatprep.subr.bf16.mxu0 %v622
  %794 = vmatpush1.bf16.msra.mxu0 %v621
  %795 = vmatprep.subr.bf16.mxu0 %v626
  %796 = vmatpush1.bf16.msra.mxu0 %v625
  %797 = vmatprep.subr.bf16.mxu0 %v630
  %798 = vmatpush1.bf16.msra.mxu0 %v629
  %799 = vmatprep.subr.bf16.mxu0 %v634
  %800 = vmatpush1.bf16.msra.mxu0 %v633
  %801 = vmatprep.subr.bf16.mxu0 %v638
  %802 = vmatpush1.bf16.msra.mxu0 %v637
  %803 = vmatprep.subr.bf16.mxu0 %v642
  %804 = vmatpush1.bf16.msra.mxu0 %v641
  %805 = vmatprep.mubr.bf16.mxu0 %v246
  %806 = vmatmul.mubr.bf16.gmra.mrb[0].mxu0 %v245
  %v807 = vpop.f32.mrb[0].mxu0
  %v808 = vadd.f32 %v148, %v807
  %v809 = vpop.f32.mrb[0].mxu0
  %v810 = vadd.f32 %v152, %v809
  %v811 = vpop.f32.mrb[0].mxu0
  %v812 = vadd.f32 %v148, %v811
  %v813 = vpop.f32.mrb[0].mxu0
  %v814 = vadd.f32 %v152, %v813
  %815 = vmatprep.mubr.bf16.mxu0 %v249
  %816 = vmatmul.mubr.bf16.gmra.mrb[0].mxu0 %v248
  %v817 = vpop.f32.mrb[0].mxu0
  %v818 = vadd.f32 %v148, %v817
  %v819 = vpop.f32.mrb[0].mxu0
  %v820 = vadd.f32 %v152, %v819
  %v821 = vpop.f32.mrb[0].mxu0
  %v822 = vadd.f32 %v148, %v821
  %v823 = vpop.f32.mrb[0].mxu0
  %v824 = vadd.f32 %v152, %v823
  %825 = vmatprep.mubr.bf16.mxu0 %v252
  %826 = vmatmul.mubr.bf16.gmra.mrb[0].mxu0 %v251
  %v827 = vpop.f32.mrb[0].mxu0
  %v828 = vadd.f32 %v148, %v827
  %v829 = vpop.f32.mrb[0].mxu0
  %v830 = vadd.f32 %v152, %v829
  %v831 = vpop.f32.mrb[0].mxu0
  %v832 = vadd.f32 %v148, %v831
  %v833 = vpop.f32.mrb[0].mxu0
  %v834 = vadd.f32 %v152, %v833
  %835 = vmatprep.mubr.bf16.mxu0 %v255
  %836 = vmatmul.mubr.bf16.gmra.mrb[0].mxu0 %v254
  %v837 = vpop.f32.mrb[0].mxu0
  %v838 = vadd.f32 %v148, %v837
  %v839 = vpop.f32.mrb[0].mxu0
  %v840 = vadd.f32 %v152, %v839
  %v841 = vpop.f32.mrb[0].mxu0
  %v842 = vadd.f32 %v148, %v841
  %v843 = vpop.f32.mrb[0].mxu0
  %v844 = vadd.f32 %v152, %v843
  %845 = vmatprep.mubr.bf16.mxu0 %v258
  %846 = vmatmul.mubr.bf16.gmra.mrb[0].mxu0 %v257
  %v847 = vpop.f32.mrb[0].mxu0
  %v848 = vadd.f32 %v148, %v847
  %v849 = vpop.f32.mrb[0].mxu0
  %v850 = vadd.f32 %v152, %v849
  %v851 = vpop.f32.mrb[0].mxu0
  %v852 = vadd.f32 %v148, %v851
  %v853 = vpop.f32.mrb[0].mxu0
  %v854 = vadd.f32 %v152, %v853
  %855 = vmatprep.mubr.bf16.mxu0 %v261
  %856 = vmatmul.mubr.bf16.gmra.mrb[0].mxu0 %v260
  %v857 = vpop.f32.mrb[0].mxu0
  %v858 = vadd.f32 %v148, %v857
  %v859 = vpop.f32.mrb[0].mxu0
  %v860 = vadd.f32 %v152, %v859
  %v861 = vpop.f32.mrb[0].mxu0
  %v862 = vadd.f32 %v148, %v861
  %v863 = vpop.f32.mrb[0].mxu0
  %v864 = vadd.f32 %v152, %v863
  %865 = vmatprep.mubr.bf16.mxu0 %v264
  %866 = vmatmul.mubr.bf16.gmra.mrb[0].mxu0 %v263
  %v867 = vpop.f32.mrb[0].mxu0
  %v868 = vadd.f32 %v148, %v867
  %v869 = vpop.f32.mrb[0].mxu0
  %v870 = vadd.f32 %v152, %v869
  %v871 = vpop.f32.mrb[0].mxu0
  %v872 = vadd.f32 %v148, %v871
  %v873 = vpop.f32.mrb[0].mxu0
  %v874 = vadd.f32 %v152, %v873
  %875 = vmatprep.mubr.bf16.mxu0 %v267
  %876 = vmatmul.mubr.bf16.gmra.mrb[0].mxu0 %v266
  %v877 = vpop.f32.mrb[0].mxu0
  %v878 = vadd.f32 %v148, %v877
  %v879 = vpop.f32.mrb[0].mxu0
  %v880 = vadd.f32 %v152, %v879
  %v881 = vpop.f32.mrb[0].mxu0
  %v882 = vadd.f32 %v148, %v881
  %v883 = vpop.f32.mrb[0].mxu0
  %v884 = vadd.f32 %v152, %v883
  %885 = vdwg.mxu0
  %886 = vmatprep.subr.bf16.mxu0 %v646
  %887 = vmatpush1.bf16.msra.mxu0 %v645
  %888 = vmatprep.subr.bf16.mxu0 %v650
  %889 = vmatpush1.bf16.msra.mxu0 %v649
  %890 = vmatprep.subr.bf16.mxu0 %v654
  %891 = vmatpush1.bf16.msra.mxu0 %v653
  %892 = vmatprep.subr.bf16.mxu0 %v658
  %893 = vmatpush1.bf16.msra.mxu0 %v657
  %894 = vmatprep.subr.bf16.mxu0 %v662
  %895 = vmatpush1.bf16.msra.mxu0 %v661
  %896 = vmatprep.subr.bf16.mxu0 %v666
  %897 = vmatpush1.bf16.msra.mxu0 %v665
  %898 = vmatprep.subr.bf16.mxu0 %v670
  %899 = vmatpush1.bf16.msra.mxu0 %v669
  %900 = vmatprep.subr.bf16.mxu0 %v674
  %901 = vmatpush1.bf16.msra.mxu0 %v673
  %902 = vmatprep.subr.bf16.mxu0 0
  %903 = vmatpush1.bf16.msra.mxu0 0
  %904 = vmatprep.subr.bf16.mxu0 0
  %905 = vmatpush1.bf16.msra.mxu0 0
  %906 = vmatprep.subr.bf16.mxu0 0
  %907 = vmatpush1.bf16.msra.mxu0 0
  %908 = vmatprep.subr.bf16.mxu0 0
  %909 = vmatpush1.bf16.msra.mxu0 0
  %910 = vmatprep.subr.bf16.mxu0 0
  %911 = vmatpush1.bf16.msra.mxu0 0
  %912 = vmatprep.subr.bf16.mxu0 0
  %913 = vmatpush1.bf16.msra.mxu0 0
  %914 = vmatprep.subr.bf16.mxu0 0
  %915 = vmatpush1.bf16.msra.mxu0 0
  %916 = vmatprep.subr.bf16.mxu0 0
  %917 = vmatpush1.bf16.msra.mxu0 0
  %918 = vmatprep.mubr.bf16.mxu0 0
  %919 = vmatmul.mubr.bf16.gmra.mrb[0].mxu0 %v247
  %v920 = vpop.f32.mrb[0].mxu0
  %v921 = vadd.f32 %v808, %v920
  %v922 = vpop.f32.mrb[0].mxu0
  %v923 = vadd.f32 %v810, %v922
  %v924 = vpop.f32.mrb[0].mxu0
  %v925 = vadd.f32 %v812, %v924
  %v926 = vpop.f32.mrb[0].mxu0
  %v927 = vadd.f32 %v814, %v926
  %928 = vmatprep.mubr.bf16.mxu0 0
  %929 = vmatmul.mubr.bf16.gmra.mrb[0].mxu0 %v250
  %v930 = vpop.f32.mrb[0].mxu0
  %v931 = vadd.f32 %v818, %v930
  %v932 = vpop.f32.mrb[0].mxu0
  %v933 = vadd.f32 %v820, %v932
  %v934 = vpop.f32.mrb[0].mxu0
  %v935 = vadd.f32 %v822, %v934
  %v936 = vpop.f32.mrb[0].mxu0
  %v937 = vadd.f32 %v824, %v936
  %938 = vmatprep.mubr.bf16.mxu0 0
  %939 = vmatmul.mubr.bf16.gmra.mrb[0].mxu0 %v253
  %v940 = vpop.f32.mrb[0].mxu0
  %v941 = vadd.f32 %v828, %v940
  %v942 = vpop.f32.mrb[0].mxu0
  %v943 = vadd.f32 %v830, %v942
  %v944 = vpop.f32.mrb[0].mxu0
  %v945 = vadd.f32 %v832, %v944
  %v946 = vpop.f32.mrb[0].mxu0
  %v947 = vadd.f32 %v834, %v946
  %948 = vmatprep.mubr.bf16.mxu0 0
  %949 = vmatmul.mubr.bf16.gmra.mrb[0].mxu0 %v256
  %v950 = vpop.f32.mrb[0].mxu0
  %v951 = vadd.f32 %v838, %v950
  %v952 = vpop.f32.mrb[0].mxu0
  %v953 = vadd.f32 %v840, %v952
  %v954 = vpop.f32.mrb[0].mxu0
  %v955 = vadd.f32 %v842, %v954
  %v956 = vpop.f32.mrb[0].mxu0
  %v957 = vadd.f32 %v844, %v956
  %958 = vmatprep.mubr.bf16.mxu0 0
  %959 = vmatmul.mubr.bf16.gmra.mrb[0].mxu0 %v259
  %v960 = vpop.f32.mrb[0].mxu0
  %v961 = vadd.f32 %v848, %v960
  %v962 = vpop.f32.mrb[0].mxu0
  %v963 = vadd.f32 %v850, %v962
  %v964 = vpop.f32.mrb[0].mxu0
  %v965 = vadd.f32 %v852, %v964
  %v966 = vpop.f32.mrb[0].mxu0
  %v967 = vadd.f32 %v854, %v966
  %968 = vmatprep.mubr.bf16.mxu0 0
  %969 = vmatmul.mubr.bf16.gmra.mrb[0].mxu0 %v262
  %v970 = vpop.f32.mrb[0].mxu0
  %v971 = vadd.f32 %v858, %v970
  %v972 = vpop.f32.mrb[0].mxu0
  %v973 = vadd.f32 %v860, %v972
  %v974 = vpop.f32.mrb[0].mxu0
  %v975 = vadd.f32 %v862, %v974
  %v976 = vpop.f32.mrb[0].mxu0
  %v977 = vadd.f32 %v864, %v976
  %978 = vmatprep.mubr.bf16.mxu0 0
  %979 = vmatmul.mubr.bf16.gmra.mrb[0].mxu0 %v265
  %v980 = vpop.f32.mrb[0].mxu0
  %v981 = vadd.f32 %v868, %v980
  %v982 = vpop.f32.mrb[0].mxu0
  %v983 = vadd.f32 %v870, %v982
  %v984 = vpop.f32.mrb[0].mxu0
  %v985 = vadd.f32 %v872, %v984
  %v986 = vpop.f32.mrb[0].mxu0
  %v987 = vadd.f32 %v874, %v986
  %988 = vmatprep.mubr.bf16.mxu0 0
  %989 = vmatmul.mubr.bf16.gmra.mrb[0].mxu0 %v268
  %v990 = vpop.f32.mrb[0].mxu0
  %v991 = vadd.f32 %v878, %v990
  %v992 = vpop.f32.mrb[0].mxu0
  %v993 = vadd.f32 %v880, %v992
  %v994 = vpop.f32.mrb[0].mxu0
  %v995 = vadd.f32 %v882, %v994
  %v996 = vpop.f32.mrb[0].mxu0
  %v997 = vadd.f32 %v884, %v996
  %998 = vdwg.mxu0
  %999 = vmatprep.subr.bf16.mxu0 %v584
  %1000 = vmatpush1.bf16.msra.mxu0 %v583
  %1001 = vmatprep.subr.bf16.mxu0 %v588
  %1002 = vmatpush1.bf16.msra.mxu0 %v587
  %1003 = vmatprep.subr.bf16.mxu0 %v592
  %1004 = vmatpush1.bf16.msra.mxu0 %v591
  %1005 = vmatprep.subr.bf16.mxu0 %v596
  %1006 = vmatpush1.bf16.msra.mxu0 %v595
  %1007 = vmatprep.subr.bf16.mxu0 %v600
  %1008 = vmatpush1.bf16.msra.mxu0 %v599
  %1009 = vmatprep.subr.bf16.mxu0 %v604
  %1010 = vmatpush1.bf16.msra.mxu0 %v603
  %1011 = vmatprep.subr.bf16.mxu0 %v608
  %1012 = vmatpush1.bf16.msra.mxu0 %v607
  %1013 = vmatprep.subr.bf16.mxu0 %v612
  %1014 = vmatpush1.bf16.msra.mxu0 %v611
  %1015 = vmatprep.subr.bf16.mxu0 %v616
  %1016 = vmatpush1.bf16.msra.mxu0 %v615
  %1017 = vmatprep.subr.bf16.mxu0 %v620
  %1018 = vmatpush1.bf16.msra.mxu0 %v619
  %1019 = vmatprep.subr.bf16.mxu0 %v624
  %1020 = vmatpush1.bf16.msra.mxu0 %v623
  %1021 = vmatprep.subr.bf16.mxu0 %v628
  %1022 = vmatpush1.bf16.msra.mxu0 %v627
  %1023 = vmatprep.subr.bf16.mxu0 %v632
  %1024 = vmatpush1.bf16.msra.mxu0 %v631
  %1025 = vmatprep.subr.bf16.mxu0 %v636
  %1026 = vmatpush1.bf16.msra.mxu0 %v635
  %1027 = vmatprep.subr.bf16.mxu0 %v640
  %1028 = vmatpush1.bf16.msra.mxu0 %v639
  %1029 = vmatprep.subr.bf16.mxu0 %v644
  %1030 = vmatpush1.bf16.msra.mxu0 %v643
  %1031 = vmatprep.mubr.bf16.mxu0 %v246
  %1032 = vmatmul.mubr.bf16.gmra.mrb[0].mxu0 %v245
  %v1033 = vpop.f32.mrb[0].mxu0
  %v1034 = vadd.f32 %v156, %v1033
  %v1035 = vpop.f32.mrb[0].mxu0
  %v1036 = vadd.f32 %v160, %v1035
  %v1037 = vpop.f32.mrb[0].mxu0
  %v1038 = vadd.f32 %v156, %v1037
  %v1039 = vpop.f32.mrb[0].mxu0
  %v1040 = vadd.f32 %v160, %v1039
  %1041 = vmatprep.mubr.bf16.mxu0 %v249
  %1042 = vmatmul.mubr.bf16.gmra.mrb[0].mxu0 %v248
  %v1043 = vpop.f32.mrb[0].mxu0
  %v1044 = vadd.f32 %v156, %v1043
  %v1045 = vpop.f32.mrb[0].mxu0
  %v1046 = vadd.f32 %v160, %v1045
  %v1047 = vpop.f32.mrb[0].mxu0
  %v1048 = vadd.f32 %v156, %v1047
  %v1049 = vpop.f32.mrb[0].mxu0
  %v1050 = vadd.f32 %v160, %v1049
  %1051 = vmatprep.mubr.bf16.mxu0 %v252
  %1052 = vmatmul.mubr.bf16.gmra.mrb[0].mxu0 %v251
  %v1053 = vpop.f32.mrb[0].mxu0
  %v1054 = vadd.f32 %v156, %v1053
  %v1055 = vpop.f32.mrb[0].mxu0
  %v1056 = vadd.f32 %v160, %v1055
  %v1057 = vpop.f32.mrb[0].mxu0
  %v1058 = vadd.f32 %v156, %v1057
  %v1059 = vpop.f32.mrb[0].mxu0
  %v1060 = vadd.f32 %v160, %v1059
  %1061 = vmatprep.mubr.bf16.mxu0 %v255
  %1062 = vmatmul.mubr.bf16.gmra.mrb[0].mxu0 %v254
  %v1063 = vpop.f32.mrb[0].mxu0
  %v1064 = vadd.f32 %v156, %v1063
  %v1065 = vpop.f32.mrb[0].mxu0
  %v1066 = vadd.f32 %v160, %v1065
  %v1067 = vpop.f32.mrb[0].mxu0
  %v1068 = vadd.f32 %v156, %v1067
  %v1069 = vpop.f32.mrb[0].mxu0
  %v1070 = vadd.f32 %v160, %v1069
  %1071 = vmatprep.mubr.bf16.mxu0 %v258
  %1072 = vmatmul.mubr.bf16.gmra.mrb[0].mxu0 %v257
  %v1073 = vpop.f32.mrb[0].mxu0
  %v1074 = vadd.f32 %v156, %v1073
  %v1075 = vpop.f32.mrb[0].mxu0
  %v1076 = vadd.f32 %v160, %v1075
  %v1077 = vpop.f32.mrb[0].mxu0
  %v1078 = vadd.f32 %v156, %v1077
  %v1079 = vpop.f32.mrb[0].mxu0
  %v1080 = vadd.f32 %v160, %v1079
  %1081 = vmatprep.mubr.bf16.mxu0 %v261
  %1082 = vmatmul.mubr.bf16.gmra.mrb[0].mxu0 %v260
  %v1083 = vpop.f32.mrb[0].mxu0
  %v1084 = vadd.f32 %v156, %v1083
  %v1085 = vpop.f32.mrb[0].mxu0
  %v1086 = vadd.f32 %v160, %v1085
  %v1087 = vpop.f32.mrb[0].mxu0
  %v1088 = vadd.f32 %v156, %v1087
  %v1089 = vpop.f32.mrb[0].mxu0
  %v1090 = vadd.f32 %v160, %v1089
  %1091 = vmatprep.mubr.bf16.mxu0 %v264
  %1092 = vmatmul.mubr.bf16.gmra.mrb[0].mxu0 %v263
  %v1093 = vpop.f32.mrb[0].mxu0
  %v1094 = vadd.f32 %v156, %v1093
  %v1095 = vpop.f32.mrb[0].mxu0
  %v1096 = vadd.f32 %v160, %v1095
  %v1097 = vpop.f32.mrb[0].mxu0
  %v1098 = vadd.f32 %v156, %v1097
  %v1099 = vpop.f32.mrb[0].mxu0
  %v1100 = vadd.f32 %v160, %v1099
  %1101 = vmatprep.mubr.bf16.mxu0 %v267
  %1102 = vmatmul.mubr.bf16.gmra.mrb[0].mxu0 %v266
  %v1103 = vpop.f32.mrb[0].mxu0
  %v1104 = vadd.f32 %v156, %v1103
  %v1105 = vpop.f32.mrb[0].mxu0
  %v1106 = vadd.f32 %v160, %v1105
  %v1107 = vpop.f32.mrb[0].mxu0
  %v1108 = vadd.f32 %v156, %v1107
  %v1109 = vpop.f32.mrb[0].mxu0
  %v1110 = vadd.f32 %v160, %v1109
  %1111 = vdwg.mxu0
  %1112 = vmatprep.subr.bf16.mxu0 %v648
  %1113 = vmatpush1.bf16.msra.mxu0 %v647
  %1114 = vmatprep.subr.bf16.mxu0 %v652
  %1115 = vmatpush1.bf16.msra.mxu0 %v651
  %1116 = vmatprep.subr.bf16.mxu0 %v656
  %1117 = vmatpush1.bf16.msra.mxu0 %v655
  %1118 = vmatprep.subr.bf16.mxu0 %v660
  %1119 = vmatpush1.bf16.msra.mxu0 %v659
  %1120 = vmatprep.subr.bf16.mxu0 %v664
  %1121 = vmatpush1.bf16.msra.mxu0 %v663
  %1122 = vmatprep.subr.bf16.mxu0 %v668
  %1123 = vmatpush1.bf16.msra.mxu0 %v667
  %1124 = vmatprep.subr.bf16.mxu0 %v672
  %1125 = vmatpush1.bf16.msra.mxu0 %v671
  %1126 = vmatprep.subr.bf16.mxu0 %v676
  %1127 = vmatpush1.bf16.msra.mxu0 %v675
  %1128 = vmatprep.subr.bf16.mxu0 0
  %1129 = vmatpush1.bf16.msra.mxu0 0
  %1130 = vmatprep.subr.bf16.mxu0 0
  %1131 = vmatpush1.bf16.msra.mxu0 0
  %1132 = vmatprep.subr.bf16.mxu0 0
  %1133 = vmatpush1.bf16.msra.mxu0 0
  %1134 = vmatprep.subr.bf16.mxu0 0
  %1135 = vmatpush1.bf16.msra.mxu0 0
  %1136 = vmatprep.subr.bf16.mxu0 0
  %1137 = vmatpush1.bf16.msra.mxu0 0
  %1138 = vmatprep.subr.bf16.mxu0 0
  %1139 = vmatpush1.bf16.msra.mxu0 0
  %1140 = vmatprep.subr.bf16.mxu0 0
  %1141 = vmatpush1.bf16.msra.mxu0 0
  %1142 = vmatprep.subr.bf16.mxu0 0
  %1143 = vmatpush1.bf16.msra.mxu0 0
  %1144 = vmatprep.mubr.bf16.mxu0 0
  %1145 = vmatmul.mubr.bf16.gmra.mrb[0].mxu0 %v247
  %v1146 = vpop.f32.mrb[0].mxu0
  %v1147 = vadd.f32 %v1034, %v1146
  %v1148 = vpop.f32.mrb[0].mxu0
  %v1149 = vadd.f32 %v1036, %v1148
  %v1150 = vpop.f32.mrb[0].mxu0
  %v1151 = vadd.f32 %v1038, %v1150
  %v1152 = vpop.f32.mrb[0].mxu0
  %v1153 = vadd.f32 %v1040, %v1152
  %1154 = vmatprep.mubr.bf16.mxu0 0
  %1155 = vmatmul.mubr.bf16.gmra.mrb[0].mxu0 %v250
  %v1156 = vpop.f32.mrb[0].mxu0
  %v1157 = vadd.f32 %v1044, %v1156
  %v1158 = vpop.f32.mrb[0].mxu0
  %v1159 = vadd.f32 %v1046, %v1158
  %v1160 = vpop.f32.mrb[0].mxu0
  %v1161 = vadd.f32 %v1048, %v1160
  %v1162 = vpop.f32.mrb[0].mxu0
  %v1163 = vadd.f32 %v1050, %v1162
  %1164 = vmatprep.mubr.bf16.mxu0 0
  %1165 = vmatmul.mubr.bf16.gmra.mrb[0].mxu0 %v253
  %v1166 = vpop.f32.mrb[0].mxu0
  %v1167 = vadd.f32 %v1054, %v1166
  %v1168 = vpop.f32.mrb[0].mxu0
  %v1169 = vadd.f32 %v1056, %v1168
  %v1170 = vpop.f32.mrb[0].mxu0
  %v1171 = vadd.f32 %v1058, %v1170
  %v1172 = vpop.f32.mrb[0].mxu0
  %v1173 = vadd.f32 %v1060, %v1172
  %1174 = vmatprep.mubr.bf16.mxu0 0
  %1175 = vmatmul.mubr.bf16.gmra.mrb[0].mxu0 %v256
  %v1176 = vpop.f32.mrb[0].mxu0
  %v1177 = vadd.f32 %v1064, %v1176
  %v1178 = vpop.f32.mrb[0].mxu0
  %v1179 = vadd.f32 %v1066, %v1178
  %v1180 = vpop.f32.mrb[0].mxu0
  %v1181 = vadd.f32 %v1068, %v1180
  %v1182 = vpop.f32.mrb[0].mxu0
  %v1183 = vadd.f32 %v1070, %v1182
  %1184 = vmatprep.mubr.bf16.mxu0 0
  %1185 = vmatmul.mubr.bf16.gmra.mrb[0].mxu0 %v259
  %v1186 = vpop.f32.mrb[0].mxu0
  %v1187 = vadd.f32 %v1074, %v1186
  %v1188 = vpop.f32.mrb[0].mxu0
  %v1189 = vadd.f32 %v1076, %v1188
  %v1190 = vpop.f32.mrb[0].mxu0
  %v1191 = vadd.f32 %v1078, %v1190
  %v1192 = vpop.f32.mrb[0].mxu0
  %v1193 = vadd.f32 %v1080, %v1192
  %1194 = vmatprep.mubr.bf16.mxu0 0
  %1195 = vmatmul.mubr.bf16.gmra.mrb[0].mxu0 %v262
  %v1196 = vpop.f32.mrb[0].mxu0
  %v1197 = vadd.f32 %v1084, %v1196
  %v1198 = vpop.f32.mrb[0].mxu0
  %v1199 = vadd.f32 %v1086, %v1198
  %v1200 = vpop.f32.mrb[0].mxu0
  %v1201 = vadd.f32 %v1088, %v1200
  %v1202 = vpop.f32.mrb[0].mxu0
  %v1203 = vadd.f32 %v1090, %v1202
  %1204 = vmatprep.mubr.bf16.mxu0 0
  %1205 = vmatmul.mubr.bf16.gmra.mrb[0].mxu0 %v265
  %v1206 = vpop.f32.mrb[0].mxu0
  %v1207 = vadd.f32 %v1094, %v1206
  %v1208 = vpop.f32.mrb[0].mxu0
  %v1209 = vadd.f32 %v1096, %v1208
  %v1210 = vpop.f32.mrb[0].mxu0
  %v1211 = vadd.f32 %v1098, %v1210
  %v1212 = vpop.f32.mrb[0].mxu0
  %v1213 = vadd.f32 %v1100, %v1212
  %1214 = vmatprep.mubr.bf16.mxu0 0
  %1215 = vmatmul.mubr.bf16.gmra.mrb[0].mxu0 %v268
  %v1216 = vpop.f32.mrb[0].mxu0
  %v1217 = vadd.f32 %v1104, %v1216
  %v1218 = vpop.f32.mrb[0].mxu0
  %v1219 = vadd.f32 %v1106, %v1218
  %v1220 = vpop.f32.mrb[0].mxu0
  %v1221 = vadd.f32 %v1108, %v1220
  %v1222 = vpop.f32.mrb[0].mxu0
  %v1223 = vadd.f32 %v1110, %v1222
  %1224 = vdwg.mxu0
  %1225 = vst [vmem:[%s3] sm:$0xff] %v921
  %1226 = vst [vmem:[%s3 + $0x8] sm:$0xff] %v923
  %1227 = vst [vmem:[%s3 + $0x10] sm:$0xff] %v1147
  %1228 = vst [vmem:[%s3 + $0x18] sm:$0xff] %v1149
  %1229 = vst [vmem:[%s3 + $0x20] sm:$0xff] %v925
  %1230 = vst [vmem:[%s3 + $0x28] sm:$0xff] %v927
  %1231 = vst [vmem:[%s3 + $0x30] sm:$0xff] %v1151
  %1232 = vst [vmem:[%s3 + $0x38] sm:$0xff] %v1153
  %1233 = vst [vmem:[%s3 + $0x40] sm:$0xff] %v931
  %1234 = vst [vmem:[%s3 + $0x48] sm:$0xff] %v933
  %1235 = vst [vmem:[%s3 + $0x50] sm:$0xff] %v1157
  %1236 = vst [vmem:[%s3 + $0x58] sm:$0xff] %v1159
  %1237 = vst [vmem:[%s3 + $0x60] sm:$0xff] %v935
  %1238 = vst [vmem:[%s3 + $0x68] sm:$0xff] %v937
  %1239 = vst [vmem:[%s3 + $0x70] sm:$0xff] %v1161
  %1240 = vst [vmem:[%s3 + $0x78] sm:$0xff] %v1163
  %1241 = vst [vmem:[%s3 + $0x80] sm:$0xff] %v941
  %1242 = vst [vmem:[%s3 + $0x88] sm:$0xff] %v943
  %1243 = vst [vmem:[%s3 + $0x90] sm:$0xff] %v1167
  %1244 = vst [vmem:[%s3 + $0x98] sm:$0xff] %v1169
  %1245 = vst [vmem:[%s3 + $0xa0] sm:$0xff] %v945
  %1246 = vst [vmem:[%s3 + $0xa8] sm:$0xff] %v947
  %1247 = vst [vmem:[%s3 + $0xb0] sm:$0xff] %v1171
  %1248 = vst [vmem:[%s3 + $0xb8] sm:$0xff] %v1173
  %1249 = vst [vmem:[%s3 + $0xc0] sm:$0xff] %v951
  %1250 = vst [vmem:[%s3 + $0xc8] sm:$0xff] %v953
  %1251 = vst [vmem:[%s3 + $0xd0] sm:$0xff] %v1177
  %1252 = vst [vmem:[%s3 + $0xd8] sm:$0xff] %v1179
  %1253 = vst [vmem:[%s3 + $0xe0] sm:$0xff] %v955
  %1254 = vst [vmem:[%s3 + $0xe8] sm:$0xff] %v957
  %1255 = vst [vmem:[%s3 + $0xf0] sm:$0xff] %v1181
  %1256 = vst [vmem:[%s3 + $0xf8] sm:$0xff] %v1183
  %1257 = vst [vmem:[%s3 + $0x100] sm:$0xff] %v961
  %1258 = vst [vmem:[%s3 + $0x108] sm:$0xff] %v963
  %1259 = vst [vmem:[%s3 + $0x110] sm:$0xff] %v1187
  %1260 = vst [vmem:[%s3 + $0x118] sm:$0xff] %v1189
  %1261 = vst [vmem:[%s3 + $0x120] sm:$0xff] %v965
  %1262 = vst [vmem:[%s3 + $0x128] sm:$0xff] %v967
  %1263 = vst [vmem:[%s3 + $0x130] sm:$0xff] %v1191
  %1264 = vst [vmem:[%s3 + $0x138] sm:$0xff] %v1193
  %1265 = vst [vmem:[%s3 + $0x140] sm:$0xff] %v971
  %1266 = vst [vmem:[%s3 + $0x148] sm:$0xff] %v973
  %1267 = vst [vmem:[%s3 + $0x150] sm:$0xff] %v1197
  %1268 = vst [vmem:[%s3 + $0x158] sm:$0xff] %v1199
  %1269 = vst [vmem:[%s3 + $0x160] sm:$0xff] %v975
  %1270 = vst [vmem:[%s3 + $0x168] sm:$0xff] %v977
  %1271 = vst [vmem:[%s3 + $0x170] sm:$0xff] %v1201
  %1272 = vst [vmem:[%s3 + $0x178] sm:$0xff] %v1203
  %1273 = vst [vmem:[%s3 + $0x180] sm:$0xff] %v981
  %1274 = vst [vmem:[%s3 + $0x188] sm:$0xff] %v983
  %1275 = vst [vmem:[%s3 + $0x190] sm:$0xff] %v1207
  %1276 = vst [vmem:[%s3 + $0x198] sm:$0xff] %v1209
  %1277 = vst [vmem:[%s3 + $0x1a0] sm:$0xff] %v985
  %1278 = vst [vmem:[%s3 + $0x1a8] sm:$0xff] %v987
  %1279 = vst [vmem:[%s3 + $0x1b0] sm:$0xff] %v1211
  %1280 = vst [vmem:[%s3 + $0x1b8] sm:$0xff] %v1213
  %1281 = vst [vmem:[%s3 + $0x1c0] sm:$0xff] %v991
  %1282 = vst [vmem:[%s3 + $0x1c8] sm:$0xff] %v993
  %1283 = vst [vmem:[%s3 + $0x1d0] sm:$0xff] %v1217
  %1284 = vst [vmem:[%s3 + $0x1d8] sm:$0xff] %v1219
  %1285 = vst [vmem:[%s3 + $0x1e0] sm:$0xff] %v995
  %1286 = vst [vmem:[%s3 + $0x1e8] sm:$0xff] %v997
  %1287 = vst [vmem:[%s3 + $0x1f0] sm:$0xff] %v1221
  %1288 = vst [vmem:[%s3 + $0x1f8] sm:$0xff] %v1223
  // Predicated region
  $region14: #{resize_conv_forward.1} parent=0 // pred_check
    _
  $region15: #{resize_conv_forward.1} parent=0 // pred_check_branch
    %1290 = sbr.rel (0) target = $region17
  $region16: #{resize_conv_forward.1} parent=0 // pred_region
    _
  $region17: #{resize_conv_forward.1} parent=0 // pred_fallthru
    _
  // Predicated region
  $region18: #{resize_conv_forward.1} parent=0 // pred_check
    _
  $region19: #{resize_conv_forward.1} parent=0 // pred_check_branch
    %1292 = sbr.rel (0) target = $region21
  $region20: #{resize_conv_forward.1} parent=0 // pred_region
    _
  $region21: #{resize_conv_forward.1} parent=0 // pred_fallthru
    _

</llo_original>
